<compile_context>
chip_gen: v5e
topology: v5e:2x2
jax: 0.10.0
libtpu: 0.0.40
codegen_flags: <defaults>
</compile_context>

<pallas_src>
import jax
import jax.numpy as jnp
from jax import lax
from jax.experimental import pallas as pl
from jax.experimental.pallas import tpu as pltpu


def _make_layer_kernel(B: int, S: int):
    """Build the kernel body; B and S are closed over as static Python ints."""

    def layer_kernel(x_ref, we_ref, be_ref, wd_ref, bd_ref, o_ref):
        # x_ref/o_ref: (B*S, L); we_ref: (L, E); be_ref: (1, E);
        # wd_ref: (E, L); bd_ref: (1, L)
        x2 = x_ref[...]                                   # (B*S, L)
        L = x2.shape[-1]

        # encode: Linear(seg_len -> embed_dim); Dropout(p=0) is identity.
        # Single M = B*S matmul on the MXU.
        enc2 = jnp.dot(x2, we_ref[...],
                       preferred_element_type=jnp.float32) + be_ref[...]   # (B*S, E)

        # attention(q=x, k=x, v=enc): softmax(q k^T / sqrt(seg_len)) v per batch.
        # TODO(synk): original Attention(device, mode) source unavailable; standard
        # scaled dot-product attention is implemented here.
        inv_scale = 1.0 / jnp.sqrt(jnp.float32(L))
        attn_blocks = []
        for b in range(B):                                # static unroll, B is tiny
            xb = x2[b * S:(b + 1) * S, :]                 # (S, L) sublane-aligned slice
            eb = enc2[b * S:(b + 1) * S, :]               # (S, E)
            # q k^T without materializing a transpose: contract last dims of both.
            s = lax.dot_general(xb, xb, (((1,), (1,)), ((), ())),
                                preferred_element_type=jnp.float32)        # (S, S)
            s = s * inv_scale
            s = s - jnp.max(s, axis=-1, keepdims=True)
            p = jnp.exp(s)
            # approx=True lowers to the EUP vrcp slot; denom divide is ~free.
            p = p * pl.reciprocal(jnp.sum(p, axis=-1, keepdims=True), approx=True)
            attn_blocks.append(jnp.dot(p, eb, preferred_element_type=jnp.float32))
        attn2 = jnp.concatenate(attn_blocks, axis=0)      # (B*S, E)

        # decode: Linear(embed_dim -> seg_len); Dropout(p=0) is identity.
        dec2 = jnp.dot(attn2, wd_ref[...],
                       preferred_element_type=jnp.float32) + bd_ref[...]   # (B*S, L)

        # ReLU + residual.
        o_ref[...] = jnp.maximum(dec2, 0.0) + x2

    return layer_kernel


def layer_forward(x, w_enc, b_enc, w_dec, b_dec):
    """x: (B, S, L); w_enc: (E, L) torch layout; w_dec: (L, E) torch layout."""
    B, S, L = x.shape
    E = w_enc.shape[0]
    # Glue (cheap/free XLA ops outside the kernel): flatten batch*seq rows and
    # pre-transpose weights so the kernel does plain row-major matmuls.
    x2 = jnp.asarray(x, jnp.float32).reshape(B * S, L)
    we_t = jnp.asarray(w_enc, jnp.float32).T          # (L, E)
    wd_t = jnp.asarray(w_dec, jnp.float32).T          # (E, L)
    be = jnp.asarray(b_enc, jnp.float32).reshape(1, E)
    bd = jnp.asarray(b_dec, jnp.float32).reshape(1, L)

    out2 = pl.pallas_call(
        _make_layer_kernel(B, S),
        out_shape=jax.ShapeDtypeStruct((B * S, L), jnp.float32),
        grid_spec=pltpu.PrefetchScalarGridSpec(
            num_scalar_prefetch=0,
            # Whole problem (~2 KB) fits a single VMEM tile: one grid step only,
            # so per-step overhead and repeated weight staging are eliminated.
            grid=(1,),
            in_specs=[
                pl.BlockSpec((B * S, L), lambda i: (0, 0)),
                pl.BlockSpec((L, E), lambda i: (0, 0)),
                pl.BlockSpec((1, E), lambda i: (0, 0)),
                pl.BlockSpec((E, L), lambda i: (0, 0)),
                pl.BlockSpec((1, L), lambda i: (0, 0)),
            ],
            out_specs=pl.BlockSpec((B * S, L), lambda i: (0, 0)),
        ),
        compiler_params=pltpu.CompilerParams(
            dimension_semantics=("arbitrary",)),
    )(x2, we_t, be, wd_t, bd)
    return out2.reshape(B, S, L)


def reference_forward(x, w_enc, b_enc, w_dec, b_dec):
    """Pure-JAX reference mirroring the PyTorch forward."""
    L = x.shape[-1]
    enc = x @ w_enc.T + b_enc
    scores = (x @ jnp.swapaxes(x, -1, -2)) / jnp.sqrt(jnp.float32(L))
    p = jax.nn.softmax(scores, axis=-1)
    attn = p @ enc
    dec = attn @ w_dec.T + b_dec
    return jnp.maximum(dec, 0.0) + x


if __name__ == "__main__":
    # Small shapes consistent with the module: seg_len=16 -> embed_dim=min(8,48)=8
    B, S, seg_len = 2, 8, 16
    embed_dim = min(seg_len // 2, 48)

    key = jax.random.PRNGKey(0)
    kx, k1, k2, k3, k4 = jax.random.split(key, 5)

    x = jax.random.normal(kx, (B, S, seg_len), dtype=jnp.float32)

    # Deterministic parameter init mimicking nn.Linear (uniform +-1/sqrt(fan_in)).
    bound_e = 1.0 / jnp.sqrt(jnp.float32(seg_len))
    bound_d = 1.0 / jnp.sqrt(jnp.float32(embed_dim))
    w_enc = jax.random.uniform(k1, (embed_dim, seg_len), jnp.float32, -bound_e, bound_e)
    b_enc = jax.random.uniform(k2, (embed_dim,), jnp.float32, -bound_e, bound_e)
    w_dec = jax.random.uniform(k3, (seg_len, embed_dim), jnp.float32, -bound_d, bound_d)
    b_dec = jax.random.uniform(k4, (seg_len,), jnp.float32, -bound_d, bound_d)

    out = layer_forward(x, w_enc, b_enc, w_dec, b_dec)
    out = jax.block_until_ready(out)

    ref = reference_forward(x, w_enc, b_enc, w_dec, b_dec)
    assert out.shape == (B, S, seg_len)
    # Tolerance relaxed vs. 1e-5 to cover the EUP approximate reciprocal in the
    # softmax denominator; still far tighter than any semantic-bug error.
    assert jnp.allclose(out, ref, atol=5e-3, rtol=5e-3), float(jnp.max(jnp.abs(out - ref)))

    print("KERNEL_OK")
</pallas_src>

<mosaic_0001>
module attributes {stable_mosaic.version = 11 : i64} {
  func.func @layer_kernel(%arg0: i32, %arg1: memref<16x16xf32, #tpu.memory_space<vmem>>, %arg2: memref<16x8xf32, #tpu.memory_space<vmem>>, %arg3: memref<1x8xf32, #tpu.memory_space<vmem>>, %arg4: memref<8x16xf32, #tpu.memory_space<vmem>>, %arg5: memref<1x16xf32, #tpu.memory_space<vmem>>, %arg6: memref<16x16xf32, #tpu.memory_space<vmem>>) attributes {dimension_semantics = [#tpu.dimension_semantics<arbitrary>], iteration_bounds = array<i64: 1>, scalar_prefetch = 0 : i64, scratch_operands = 0 : i64, tpu.core_type = #tpu.core_type<tc>, window_params = [{pipeline_mode = #tpu.pipeline_mode<synchronous>, transform_indices = @transform_0, window_bounds = array<i64: 16, 16>}, {pipeline_mode = #tpu.pipeline_mode<synchronous>, transform_indices = @transform_1, window_bounds = array<i64: 16, 8>}, {pipeline_mode = #tpu.pipeline_mode<synchronous>, transform_indices = @transform_2, window_bounds = array<i64: 1, 8>}, {pipeline_mode = #tpu.pipeline_mode<synchronous>, transform_indices = @transform_3, window_bounds = array<i64: 8, 16>}, {pipeline_mode = #tpu.pipeline_mode<synchronous>, transform_indices = @transform_4, window_bounds = array<i64: 1, 16>}, {pipeline_mode = #tpu.pipeline_mode<synchronous>, transform_indices = @transform_5, window_bounds = array<i64: 16, 16>}]} {
    %c0 = arith.constant 0 : index
    %c0_0 = arith.constant 0 : index
    %0 = vector.load %arg1[%c0, %c0_0] : memref<16x16xf32, #tpu.memory_space<vmem>>, vector<16x16xf32>
    %c0_1 = arith.constant 0 : index
    %c0_2 = arith.constant 0 : index
    %1 = vector.load %arg2[%c0_1, %c0_2] : memref<16x8xf32, #tpu.memory_space<vmem>>, vector<16x8xf32>
    %cst = arith.constant dense<0.000000e+00> : vector<16x8xf32>
    %2 = tpu.matmul %0, %1, %cst {dimension_numbers = #tpu.dot_dimension_numbers<[1], [0], [0], [1], [0, 0, 1, 1], [], []>} : vector<16x16xf32>, vector<16x8xf32>, vector<16x8xf32> -> vector<16x8xf32>
    %c0_3 = arith.constant 0 : index
    %c0_4 = arith.constant 0 : index
    %3 = vector.load %arg3[%c0_3, %c0_4] : memref<1x8xf32, #tpu.memory_space<vmem>>, vector<1x8xf32>
    %4 = vector.broadcast %3 : vector<1x8xf32> to vector<16x8xf32>
    %5 = arith.addf %2, %4 : vector<16x8xf32>
    %cst_5 = arith.constant 1.600000e+01 : f32
    %6 = math.sqrt %cst_5 : f32
    %cst_6 = arith.constant 1.000000e+00 : f32
    %7 = arith.divf %cst_6, %6 : f32
    %8 = vector.extract_strided_slice %0 {offsets = [0, 0], sizes = [8, 16], strides = [1, 1]} : vector<16x16xf32> to vector<8x16xf32>
    %9 = vector.extract_strided_slice %5 {offsets = [0, 0], sizes = [8, 8], strides = [1, 1]} : vector<16x8xf32> to vector<8x8xf32>
    %cst_7 = arith.constant dense<0.000000e+00> : vector<8x8xf32>
    %10 = tpu.matmul %8, %8, %cst_7 {dimension_numbers = #tpu.dot_dimension_numbers<[1], [1], [0], [0], [0, 0, 1, 0], [], []>} : vector<8x16xf32>, vector<8x16xf32>, vector<8x8xf32> -> vector<8x8xf32>
    %11 = vector.broadcast %7 : f32 to vector<8x8xf32>
    %12 = arith.mulf %10, %11 : vector<8x8xf32>
    %cst_8 = arith.constant dense<0xFF800000> : vector<8xf32>
    %13 = vector.multi_reduction <maximumf>, %12, %cst_8 [1] : vector<8x8xf32> to vector<8xf32>
    %14 = vector.shape_cast %13 : vector<8xf32> to vector<8x1xf32>
    %15 = vector.broadcast %14 : vector<8x1xf32> to vector<8x8xf32>
    %16 = arith.subf %12, %15 : vector<8x8xf32>
    %17 = math.exp %16 : vector<8x8xf32>
    %cst_9 = arith.constant dense<0.000000e+00> : vector<8xf32>
    %18 = vector.multi_reduction <add>, %17, %cst_9 [1] : vector<8x8xf32> to vector<8xf32>
    %19 = vector.shape_cast %18 : vector<8xf32> to vector<8x1xf32>
    %20 = tpu.reciprocal %19 {approx = true} : vector<8x1xf32> -> vector<8x1xf32>
    %21 = vector.broadcast %20 : vector<8x1xf32> to vector<8x8xf32>
    %22 = arith.mulf %17, %21 : vector<8x8xf32>
    %cst_10 = arith.constant dense<0.000000e+00> : vector<8x8xf32>
    %23 = tpu.matmul %22, %9, %cst_10 {dimension_numbers = #tpu.dot_dimension_numbers<[1], [0], [0], [1], [0, 0, 1, 1], [], []>} : vector<8x8xf32>, vector<8x8xf32>, vector<8x8xf32> -> vector<8x8xf32>
    %24 = vector.extract_strided_slice %0 {offsets = [8, 0], sizes = [8, 16], strides = [1, 1]} : vector<16x16xf32> to vector<8x16xf32>
    %25 = vector.extract_strided_slice %5 {offsets = [8, 0], sizes = [8, 8], strides = [1, 1]} : vector<16x8xf32> to vector<8x8xf32>
    %cst_11 = arith.constant dense<0.000000e+00> : vector<8x8xf32>
    %26 = tpu.matmul %24, %24, %cst_11 {dimension_numbers = #tpu.dot_dimension_numbers<[1], [1], [0], [0], [0, 0, 1, 0], [], []>} : vector<8x16xf32>, vector<8x16xf32>, vector<8x8xf32> -> vector<8x8xf32>
    %27 = vector.broadcast %7 : f32 to vector<8x8xf32>
    %28 = arith.mulf %26, %27 : vector<8x8xf32>
    %cst_12 = arith.constant dense<0xFF800000> : vector<8xf32>
    %29 = vector.multi_reduction <maximumf>, %28, %cst_12 [1] : vector<8x8xf32> to vector<8xf32>
    %30 = vector.shape_cast %29 : vector<8xf32> to vector<8x1xf32>
    %31 = vector.broadcast %30 : vector<8x1xf32> to vector<8x8xf32>
    %32 = arith.subf %28, %31 : vector<8x8xf32>
    %33 = math.exp %32 : vector<8x8xf32>
    %cst_13 = arith.constant dense<0.000000e+00> : vector<8xf32>
    %34 = vector.multi_reduction <add>, %33, %cst_13 [1] : vector<8x8xf32> to vector<8xf32>
    %35 = vector.shape_cast %34 : vector<8xf32> to vector<8x1xf32>
    %36 = tpu.reciprocal %35 {approx = true} : vector<8x1xf32> -> vector<8x1xf32>
    %37 = vector.broadcast %36 : vector<8x1xf32> to vector<8x8xf32>
    %38 = arith.mulf %33, %37 : vector<8x8xf32>
    %cst_14 = arith.constant dense<0.000000e+00> : vector<8x8xf32>
    %39 = tpu.matmul %38, %25, %cst_14 {dimension_numbers = #tpu.dot_dimension_numbers<[1], [0], [0], [1], [0, 0, 1, 1], [], []>} : vector<8x8xf32>, vector<8x8xf32>, vector<8x8xf32> -> vector<8x8xf32>
    %40 = tpu.concatenate %23, %39 in 0 : vector<8x8xf32>, vector<8x8xf32> -> vector<16x8xf32>
    %c0_15 = arith.constant 0 : index
    %c0_16 = arith.constant 0 : index
    %41 = vector.load %arg4[%c0_15, %c0_16] : memref<8x16xf32, #tpu.memory_space<vmem>>, vector<8x16xf32>
    %cst_17 = arith.constant dense<0.000000e+00> : vector<16x16xf32>
    %42 = tpu.matmul %40, %41, %cst_17 {dimension_numbers = #tpu.dot_dimension_numbers<[1], [0], [0], [1], [0, 0, 1, 1], [], []>} : vector<16x8xf32>, vector<8x16xf32>, vector<16x16xf32> -> vector<16x16xf32>
    %c0_18 = arith.constant 0 : index
    %c0_19 = arith.constant 0 : index
    %43 = vector.load %arg5[%c0_18, %c0_19] : memref<1x16xf32, #tpu.memory_space<vmem>>, vector<1x16xf32>
    %44 = vector.broadcast %43 : vector<1x16xf32> to vector<16x16xf32>
    %45 = arith.addf %42, %44 : vector<16x16xf32>
    %cst_20 = arith.constant 0.000000e+00 : f32
    %46 = vector.broadcast %cst_20 : f32 to vector<16x16xf32>
    %47 = arith.maximumf %45, %46 : vector<16x16xf32>
    %48 = arith.addf %47, %0 : vector<16x16xf32>
    %c0_21 = arith.constant 0 : index
    %c0_22 = arith.constant 0 : index
    %49 = vector.load %arg6[%c0_21, %c0_22] : memref<16x16xf32, #tpu.memory_space<vmem>>, vector<16x16xf32>
    tpu.vector_store %arg6[%c0_21, %c0_22], %48 {strides = array<i32>} : memref<16x16xf32, #tpu.memory_space<vmem>>, vector<16x16xf32>,
    return
  }
  func.func @transform_0(%arg0: i32) -> (i32, i32) {
    %c0_i32 = arith.constant 0 : i32
    %c0_i32_0 = arith.constant 0 : i32
    %c0_i32_1 = arith.constant 0 : i32
    return %c0_i32, %c0_i32_0 : i32, i32
  }
  func.func @transform_1(%arg0: i32) -> (i32, i32) {
    %c0_i32 = arith.constant 0 : i32
    %c0_i32_0 = arith.constant 0 : i32
    %c0_i32_1 = arith.constant 0 : i32
    return %c0_i32, %c0_i32_0 : i32, i32
  }
  func.func @transform_2(%arg0: i32) -> (i32, i32) {
    %c0_i32 = arith.constant 0 : i32
    %c0_i32_0 = arith.constant 0 : i32
    %c0_i32_1 = arith.constant 0 : i32
    return %c0_i32, %c0_i32_0 : i32, i32
  }
  func.func @transform_3(%arg0: i32) -> (i32, i32) {
    %c0_i32 = arith.constant 0 : i32
    %c0_i32_0 = arith.constant 0 : i32
    %c0_i32_1 = arith.constant 0 : i32
    return %c0_i32, %c0_i32_0 : i32, i32
  }
  func.func @transform_4(%arg0: i32) -> (i32, i32) {
    %c0_i32 = arith.constant 0 : i32
    %c0_i32_0 = arith.constant 0 : i32
    %c0_i32_1 = arith.constant 0 : i32
    return %c0_i32, %c0_i32_0 : i32, i32
  }
  func.func @transform_5(%arg0: i32) -> (i32, i32) {
    %c0_i32 = arith.constant 0 : i32
    %c0_i32_0 = arith.constant 0 : i32
    %c0_i32_1 = arith.constant 0 : i32
    return %c0_i32, %c0_i32_0 : i32, i32
  }
}

</mosaic_0001>

<llo_original>
// kernel: tpu_custom_call.1
$region0: #{tpu_custom_call.1}
  #allocation0 [shape = 'u32[]', space=smem, size = 0x4, offset = 0x4, fixed_abs, tag = 'smem constant byte address 0x4 - core index']
  #allocation1 [shape = 'u32[72,128]{1,0:T(1,128)}', space=vmem, size = 0x9000, scoped, tag = 'internal scratch']
  %s0 = inlined_call_operand.vmem [shape: f32[16,16], index: 0, kind: input, shape index: {}]
  %s1 = inlined_call_operand.vmem [shape: f32[16,8], index: 1, kind: input, shape index: {}]
  %s2 = inlined_call_operand.vmem [shape: f32[1,8], index: 2, kind: input, shape index: {}]
  %s3 = inlined_call_operand.vmem [shape: f32[8,16], index: 3, kind: input, shape index: {}]
  %s4 = inlined_call_operand.vmem [shape: f32[1,16], index: 4, kind: input, shape index: {}]
  %s5 = inlined_call_operand.hbm [shape: f32[16,16], index: 5, kind: output, shape index: {}]
  %s6 = sld [smem:[#allocation0]]
  $region30: #{tpu_custom_call.1} parent=0
    _
  %s8 = ssub.s32 1, %s6
  %s9 = scalar_select 0, %s8, %s6
  $region1: #{tpu_custom_call.1} parent=0
    #allocation2 [shape = 'u8[8192]{0}', space=vmem, size = 0x2000, scoped, tag = 'output window, operand 0, single buffered']
    #allocation3 [shape = 's32[1]{0}', space=sflag, size = 0x4, scoped, tag = 'scoped memory for tpu_custom_call.1']
    %10 = vsyncpa [#allocation3], 0
    // Predicated region
    $region2: #{tpu_custom_call.1} parent=1 // pred_check
      _
    $region3: #{tpu_custom_call.1} parent=1 // pred_check_branch
      %12 = sbr.rel (0) target = $region5
    $region4: #{tpu_custom_call.1} parent=1 // pred_region
      _
    $region5: #{tpu_custom_call.1} parent=1 // pred_fallthru
      _
    // Predicated region
    $region6: #{tpu_custom_call.1} parent=1 // pred_check
      _
    $region7: #{tpu_custom_call.1} parent=1 // pred_check_branch
      %14 = sbr.rel (0) target = $region9
    $region8: #{tpu_custom_call.1} parent=1 // pred_region
      _
    $region9: #{tpu_custom_call.1} parent=1 // pred_fallthru
      _
    // Predicated region
    $region10: #{tpu_custom_call.1} parent=1 // pred_check
      _
    $region11: #{tpu_custom_call.1} parent=1 // pred_check_branch
      %16 = sbr.rel (0) target = $region13
    $region12: #{tpu_custom_call.1} parent=1 // pred_region
      _
    $region13: #{tpu_custom_call.1} parent=1 // pred_fallthru
      _
    // Predicated region
    $region14: #{tpu_custom_call.1} parent=1 // pred_check
      _
    $region15: #{tpu_custom_call.1} parent=1 // pred_check_branch
      %18 = sbr.rel (0) target = $region17
    $region16: #{tpu_custom_call.1} parent=1 // pred_region
      _
    $region17: #{tpu_custom_call.1} parent=1 // pred_fallthru
      _
    // Predicated region
    $region18: #{tpu_custom_call.1} parent=1 // pred_check
      _
    $region19: #{tpu_custom_call.1} parent=1 // pred_check_branch
      %20 = sbr.rel (0) target = $region21
    $region20: #{tpu_custom_call.1} parent=1 // pred_region
      _
    $region21: #{tpu_custom_call.1} parent=1 // pred_fallthru
      _
    %v21 = vld [vmem:[%s0] sm:$0xff]
    %v22 = vld [vmem:[%s0 + $0x8] sm:$0xff]
    %v23 = vld [vmem:[%s1] sm:$0xff]
    %v24 = vld [vmem:[%s1 + $0x8] sm:$0xff]
    %v25 = vld [vmem:[%s2] sm:$0x1]
    %v27 = vperm.slane %v25, 0
    %vm29 = vcmask 130048
    %v31 = vsel %vm29, %v21, 0
    %v34 = vsel %vm29, %v22, 0
    %36 = vmatpush.msra.mxu0 0.0
    %37 = vmatpush.msra.mxu0 0.0
    %38 = vmatpush.msra.mxu0 0.0
    %39 = vmatpush.msra.mxu0 0.0
    %40 = vmatpush.msra.mxu0 0.0
    %41 = vmatpush.msra.mxu0 0.0
    %42 = vmatpush.msra.mxu0 0.0
    %43 = vmatpush.msra.mxu0 0.0
    %44 = vmatpush.msra.mxu0 0.0
    %45 = vmatpush.msra.mxu0 0.0
    %46 = vmatpush.msra.mxu0 0.0
    %47 = vmatpush.msra.mxu0 0.0
    %48 = vmatpush.msra.mxu0 0.0
    %49 = vmatpush.msra.mxu0 0.0
    %50 = vmatpush.msra.mxu0 %v24
    %51 = vmatpush.msra.mxu0 %v23
    %52 = vmatmul.f32.gmra.mxu0 %v31
    %v53 = vpop.f32.mrf.mxu0
    %v54 = vadd.f32 %v27, %v53
    %55 = vmatmul.f32.gmra.mxu0 %v34
    %v56 = vpop.f32.mrf.mxu0
    %v57 = vadd.f32 %v27, %v56
    %58 = vdwg.mxu0
    %59 = vmatpush.xpose.msra.mxu0 0.0
    %60 = vmatpush.xpose.msra.mxu0 0.0
    %61 = vmatpush.xpose.msra.mxu0 0.0
    %62 = vmatpush.xpose.msra.mxu0 0.0
    %63 = vmatpush.xpose.msra.mxu0 0.0
    %64 = vmatpush.xpose.msra.mxu0 0.0
    %65 = vmatpush.xpose.msra.mxu0 0.0
    %66 = vmatpush.xpose.msra.mxu0 0.0
    %67 = vmatpush.xpose.msra.mxu0 0.0
    %68 = vmatpush.xpose.msra.mxu0 0.0
    %69 = vmatpush.xpose.msra.mxu0 0.0
    %70 = vmatpush.xpose.msra.mxu0 0.0
    %71 = vmatpush.xpose.msra.mxu0 0.0
    %72 = vmatpush.xpose.msra.mxu0 0.0
    %73 = vmatpush.xpose.msra.mxu0 0.0
    %74 = vmatpush.xpose.msra.mxu0 %v31
    %75 = vmatmul.f32.gmra.mxu0 %v31
    %v76 = vpop.f32.mrf.mxu0
    %v77 = vadd.f32 0.0, %v76
    %78 = vdwg.mxu0
    %v79 = vmul.f32 %v77, 0.25
    %vm80 = vcmask 64512
    %v81 = vsel %vm80, %v79, -inf
    %82 = vmax.xlane.f32.xlu0 %v81
    %v83 = vpop.xlane.xlu0 %82
    %v84 = vsub.f32 %v79, %v83
    %v85 = vmul.f32 %v84, 1.442695
    %v86 = vpow.pop %v85
    %v87 = vsel %vm80, %v86, 0.0
    %88 = vadd.xlane.f32.xlu0 %v87
    %v89 = vpop.xlane.xlu0 %88
    %v90 = vrcp.pop %v89
    %v91 = vmul.f32 %v86, %v90
    %v93 = vsel %vm80, %v91, 0
    %95 = vmatpush.msra.mxu0 0.0
    %96 = vmatpush.msra.mxu0 0.0
    %97 = vmatpush.msra.mxu0 0.0
    %98 = vmatpush.msra.mxu0 0.0
    %99 = vmatpush.msra.mxu0 0.0
    %100 = vmatpush.msra.mxu0 0.0
    %101 = vmatpush.msra.mxu0 0.0
    %102 = vmatpush.msra.mxu0 0.0
    %103 = vmatpush.msra.mxu0 0.0
    %104 = vmatpush.msra.mxu0 0.0
    %105 = vmatpush.msra.mxu0 0.0
    %106 = vmatpush.msra.mxu0 0.0
    %107 = vmatpush.msra.mxu0 0.0
    %108 = vmatpush.msra.mxu0 0.0
    %109 = vmatpush.msra.mxu0 0.0
    %110 = vmatpush.msra.mxu0 %v54
    %111 = vmatmul.f32.gmra.mxu0 %v93
    %v112 = vpop.f32.mrf.mxu0
    %v113 = vadd.f32 0.0, %v112
    %114 = vdwg.mxu0
    %115 = vmatpush.xpose.msra.mxu0 0.0
    %116 = vmatpush.xpose.msra.mxu0 0.0
    %117 = vmatpush.xpose.msra.mxu0 0.0
    %118 = vmatpush.xpose.msra.mxu0 0.0
    %119 = vmatpush.xpose.msra.mxu0 0.0
    %120 = vmatpush.xpose.msra.mxu0 0.0
    %121 = vmatpush.xpose.msra.mxu0 0.0
    %122 = vmatpush.xpose.msra.mxu0 0.0
    %123 = vmatpush.xpose.msra.mxu0 0.0
    %124 = vmatpush.xpose.msra.mxu0 0.0
    %125 = vmatpush.xpose.msra.mxu0 0.0
    %126 = vmatpush.xpose.msra.mxu0 0.0
    %127 = vmatpush.xpose.msra.mxu0 0.0
    %128 = vmatpush.xpose.msra.mxu0 0.0
    %129 = vmatpush.xpose.msra.mxu0 0.0
    %130 = vmatpush.xpose.msra.mxu0 %v34
    %131 = vmatmul.f32.gmra.mxu0 %v34
    %v132 = vpop.f32.mrf.mxu0
    %v133 = vadd.f32 0.0, %v132
    %134 = vdwg.mxu0
    %v135 = vmul.f32 %v133, 0.25
    %v136 = vsel %vm80, %v135, -inf
    %137 = vmax.xlane.f32.xlu0 %v136
    %v138 = vpop.xlane.xlu0 %137
    %v139 = vsub.f32 %v135, %v138
    %v140 = vmul.f32 %v139, 1.442695
    %v141 = vpow.pop %v140
    %v142 = vsel %vm80, %v141, 0.0
    %143 = vadd.xlane.f32.xlu0 %v142
    %v144 = vpop.xlane.xlu0 %143
    %v145 = vrcp.pop %v144
    %v146 = vmul.f32 %v141, %v145
    %v148 = vsel %vm80, %v146, 0
    %150 = vmatpush.msra.mxu0 0.0
    %151 = vmatpush.msra.mxu0 0.0
    %152 = vmatpush.msra.mxu0 0.0
    %153 = vmatpush.msra.mxu0 0.0
    %154 = vmatpush.msra.mxu0 0.0
    %155 = vmatpush.msra.mxu0 0.0
    %156 = vmatpush.msra.mxu0 0.0
    %157 = vmatpush.msra.mxu0 0.0
    %158 = vmatpush.msra.mxu0 0.0
    %159 = vmatpush.msra.mxu0 0.0
    %160 = vmatpush.msra.mxu0 0.0
    %161 = vmatpush.msra.mxu0 0.0
    %162 = vmatpush.msra.mxu0 0.0
    %163 = vmatpush.msra.mxu0 0.0
    %164 = vmatpush.msra.mxu0 0.0
    %165 = vmatpush.msra.mxu0 %v57
    %166 = vmatmul.f32.gmra.mxu0 %v148
    %v167 = vpop.f32.mrf.mxu0
    %v168 = vadd.f32 0.0, %v167
    %169 = vdwg.mxu0
    %v170 = vld [vmem:[%s3] sm:$0xff]
    %v171 = vld [vmem:[%s4] sm:$0x1]
    %v173 = vperm.slane %v171, 0
    %v176 = vsel %vm80, %v113, 0
    %v179 = vsel %vm80, %v168, 0
    %181 = vmatpush.msra.mxu0 0.0
    %182 = vmatpush.msra.mxu0 0.0
    %183 = vmatpush.msra.mxu0 0.0
    %184 = vmatpush.msra.mxu0 0.0
    %185 = vmatpush.msra.mxu0 0.0
    %186 = vmatpush.msra.mxu0 0.0
    %187 = vmatpush.msra.mxu0 0.0
    %188 = vmatpush.msra.mxu0 0.0
    %189 = vmatpush.msra.mxu0 0.0
    %190 = vmatpush.msra.mxu0 0.0
    %191 = vmatpush.msra.mxu0 0.0
    %192 = vmatpush.msra.mxu0 0.0
    %193 = vmatpush.msra.mxu0 0.0
    %194 = vmatpush.msra.mxu0 0.0
    %195 = vmatpush.msra.mxu0 0.0
    %196 = vmatpush.msra.mxu0 %v170
    %197 = vmatmul.f32.gmra.mxu0 %v176
    %v198 = vpop.f32.mrf.mxu0
    %v199 = vadd.f32 %v173, %v198
    %200 = vmatmul.f32.gmra.mxu0 %v179
    %v201 = vpop.f32.mrf.mxu0
    %v202 = vadd.f32 %v173, %v201
    %203 = vdwg.mxu0
    %v204 = vmax.f32 %v199, 0.0
    %v205 = vmax.f32 %v202, 0.0
    %v206 = vadd.f32 %v204, %v21
    %v207 = vadd.f32 %v205, %v22
    %208 = vst.msk [vmem:[#allocation2] sm:$0xff] %vm29, %v206
    %209 = vst.msk [vmem:[#allocation2 + $0x8] sm:$0xff] %vm29, %v207
    // Predicated region
    $region22: #{tpu_custom_call.1} parent=1 // pred_check
      _
    $region23: #{tpu_custom_call.1} parent=1 // pred_check_branch
      %211 = sbr.rel (0) target = $region25
    $region24: #{tpu_custom_call.1} parent=1 // pred_region
      %213 = vsyncadd [#allocation3], 0
      %s214 = sshll.u32 [#allocation2], 4
      %s215 = int_to_ptr.vmem [resolvable:$true] %s214
      %s216 = sshll.u32 %s5, 4
      %s217 = int_to_ptr.hbm [resolvable:$true] %s216
      %222 = dma.vmem_to_hbm [thread:$0]  %s215, 256, %s217, [#allocation3], 128, 128, 8
    $region25: #{tpu_custom_call.1} parent=1 // pred_fallthru
      _
    // Predicated region
    $region26: #{tpu_custom_call.1} parent=1 // pred_check
      _
    $region27: #{tpu_custom_call.1} parent=1 // pred_check_branch
      %224 = sbr.rel (0) target = $region29
    $region28: #{tpu_custom_call.1} parent=1 // pred_region
      %226 = dma.done [#allocation3], 256
    $region29: #{tpu_custom_call.1} parent=1 // pred_fallthru
      _
    %227 = vsyncpa [#allocation3], 1

</llo_original>
